<compile_context>
chip_gen: v7x
topology: tpu7x:2x2x1
jax: 0.10.0
libtpu: 0.0.40
codegen_flags: <defaults>
</compile_context>

<pallas_src>
import jax
import jax.numpy as jnp
from jax import lax
from jax.experimental import pallas as pl
from jax.experimental.pallas import tpu as pltpu


def _round_up(x, m):
    return ((x + m - 1) // m) * m


def _choose_bt(B, target_bt=64):
    """Batches per grid step.

    Small B: one grid step covering the whole batch (block == full array, so
    no sublane-alignment concern).  Larger B: a multiple of 8 (sublane-aligned
    output slabs) capped at `target_bt`, while keeping >= 2 grid steps so the
    'parallel' grid axis can shard over v7x's two TensorCores.
    """
    if B <= 8:
        return max(B, 1)
    return min(target_bt, _round_up(pl.cdiv(B, 2), 8))


def _make_attention_kernel(bt, unroll):
    """Kernel processing `bt` batches per grid step, pixels on the lane axis."""

    def kernel(enc_ref, dec_ref, w_enc_ref, v_ref, ctx_ref, alpha_ref):
        w_enc = w_enc_ref[...]                       # (D, C)
        v_row = v_ref[...]                           # (1, D)
        dec_t = dec_ref[0]                           # (D, bt) decoder projections
        d_dim = dec_t.shape[0]
        lane_ids = lax.broadcasted_iota(jnp.int32, (d_dim, bt), 1)

        def body(b, carry):
            e = enc_ref[b]                           # (C, P) -- pixels on lanes
            # (D, 1) decoder column for batch b via one-hot lane select+reduce
            # (VPU select + XLU lane reduce; both slots are otherwise idle).
            dcol = jnp.sum(jnp.where(lane_ids == b, dec_t, 0.0),
                           axis=1, keepdims=True)    # (D, 1)
            # pre^T = W_enc @ e + dec column (broadcast over P lanes).
            pre = jnp.dot(w_enc, e, preferred_element_type=jnp.float32) + dcol
            # TODO(synk): on v6e/v7x evaluate tanh (and exp) in bf16 once the
            # 1e-5 f32 tolerance is relaxed; keep f32 on v5e.
            a = jnp.tanh(pre)                        # (D, P)
            # scores = v @ a : M=1 but N=P fills the MXU lanes.     -> (1, P)
            s = jnp.dot(v_row, a, preferred_element_type=jnp.float32)
            # Numerically stable softmax over the pixel (lane) axis.
            m = jnp.max(s, axis=-1, keepdims=True)
            ex = jnp.exp(s - m)
            denom = jnp.sum(ex, axis=-1, keepdims=True)
            r = pl.reciprocal(denom, approx=True)    # EUP slot
            r = r * (2.0 - denom * r)                # one Newton step -> f32 acc.
            alpha = ex * r                           # (1, P), lane dense
            alpha_ref[pl.ds(b, 1), :] = alpha
            # ctx[c] = sum_p e[c, p] * alpha[p] -> MXU contraction over P.
            ctx_ref[pl.ds(b, 1), :] = lax.dot_general(
                alpha, e,
                dimension_numbers=(((1,), (1,)), ((), ())),
                preferred_element_type=jnp.float32)  # (1, C)
            return carry

        lax.fori_loop(0, bt, body, 0, unroll=unroll)

    return kernel


def attention_forward(encoder_features, decoder_hidden, params, *, target_bt=64):
    """encoder_features: (B, C, H, W) NCHW (PyTorch convention).
       decoder_hidden:   (B, D).
       Returns (context_vector (B, C), alpha (B, P, 1))."""
    B, C, H, W = encoder_features.shape
    P = H * W
    D = decoder_hidden.shape[1]

    bt = _choose_bt(B, target_bt)
    B_pad = _round_up(B, bt)
    grid = B_pad // bt
    unroll = max(1, min(bt, 8))

    # "P-on-lanes" layout: (B, C, P) is just a reshape of NCHW (no transpose).
    # TODO(synk): store enc as bf16 (keep f32 dots/softmax) to halve the
    # dominant HBM stream once the 1e-5 f32 validation tolerance is relaxed.
    enc = encoder_features.reshape(B, C, P).astype(jnp.float32)

    w = params["attn_w"]                   # (D, D + C); input cols = [dec | enc]
    w_dec = w[:, :D]                       # (D, D)
    w_enc = w[:, D:]                       # (D, C)
    v_row = params["v_w"]                  # (1, D)
    # Hoist the decoder projection + bias into one tiny batched XLA matmul.
    dec_proj = (decoder_hidden.astype(jnp.float32) @ w_dec.T
                + params["attn_b"])        # (B, D)

    if B_pad != B:
        pad = B_pad - B
        enc = jnp.pad(enc, ((0, pad), (0, 0), (0, 0)))
        dec_proj = jnp.pad(dec_proj, ((0, pad), (0, 0)))

    # (grid, D, bt): one contiguous per-step DMA; per-batch columns are ready
    # for the lane-broadcast add (no 1->128 lane-padded (D, 1) tiles).
    dec3 = jnp.transpose(dec_proj.reshape(grid, bt, D), (0, 2, 1))

    # VMEM per step (bt=64, f32): enc ~512 KiB + outputs ~100 KiB, double-
    # buffered < 1.5 MiB — well under even v5e's 16 MiB default scoped VMEM.
    ctx, alpha = pl.pallas_call(
        _make_attention_kernel(bt, unroll),
        grid=(grid,),
        in_specs=[
            pl.BlockSpec((bt, C, P), lambda i: (i, 0, 0)),   # encoder (B, C, P)
            pl.BlockSpec((1, D, bt), lambda i: (i, 0, 0)),   # decoder projection
            pl.BlockSpec((D, C), lambda i: (0, 0)),          # W_enc
            pl.BlockSpec((1, D), lambda i: (0, 0)),          # v row
        ],
        out_specs=[
            pl.BlockSpec((bt, C), lambda i: (i, 0)),         # context (dense slab)
            pl.BlockSpec((bt, P), lambda i: (i, 0)),         # alpha (lane dense)
        ],
        out_shape=[
            jax.ShapeDtypeStruct((B_pad, C), jnp.float32),
            jax.ShapeDtypeStruct((B_pad, P), jnp.float32),
        ],
        compiler_params=pltpu.CompilerParams(
            dimension_semantics=("parallel",)),
    )(enc, dec3, w_enc, v_row)

    # Match the PyTorch module outputs: (B, C) and (B, P, 1).
    return ctx[:B], alpha[:B].reshape(B, P, 1)


def init_params(key, encoder_dim, decoder_dim):
    k1, k2, k3 = jax.random.split(key, 3)
    in_dim = encoder_dim + decoder_dim
    bound_attn = 1.0 / jnp.sqrt(in_dim)
    bound_v = 1.0 / jnp.sqrt(decoder_dim)
    return {
        "attn_w": jax.random.uniform(k1, (decoder_dim, in_dim), jnp.float32,
                                     -bound_attn, bound_attn),
        "attn_b": jax.random.uniform(k2, (decoder_dim,), jnp.float32,
                                     -bound_attn, bound_attn),
        "v_w": jax.random.uniform(k3, (1, decoder_dim), jnp.float32,
                                  -bound_v, bound_v),
    }


def reference_forward(encoder_features, decoder_hidden, params):
    """Pure-JAX reference mirroring the PyTorch forward (for verification)."""
    B, C, H, W = encoder_features.shape
    P = H * W
    enc = jnp.transpose(encoder_features, (0, 2, 3, 1)).reshape(B, P, C)
    dec = jnp.repeat(decoder_hidden[:, None, :], P, axis=1)
    attn_in = jnp.concatenate([dec, enc], axis=2)
    a = jnp.tanh(attn_in @ params["attn_w"].T + params["attn_b"])
    scores = (a @ params["v_w"].T)[..., 0]
    alpha = jax.nn.softmax(scores, axis=1)[..., None]
    ctx = jnp.sum(enc * alpha, axis=1)
    return ctx, alpha


if __name__ == "__main__":
    B, C, H, W = 2, 4, 16, 16          # encoder_dim = 4
    D = 32                              # decoder_dim = 32

    key = jax.random.PRNGKey(0)
    k_enc, k_hid, k_par = jax.random.split(key, 3)
    encoder_features = jax.random.normal(k_enc, (B, C, H, W), jnp.float32)
    decoder_hidden = jax.random.normal(k_hid, (B, D), jnp.float32)
    params = init_params(k_par, C, D)

    ctx, alpha = attention_forward(encoder_features, decoder_hidden, params)
    jax.block_until_ready((ctx, alpha))

    ctx_r, alpha_r = reference_forward(encoder_features, decoder_hidden, params)
    assert jnp.allclose(ctx, ctx_r, atol=1e-5, rtol=1e-5), "context mismatch"
    assert jnp.allclose(alpha, alpha_r, atol=1e-5, rtol=1e-5), "alpha mismatch"

    print("KERNEL_OK")
</pallas_src>

<mosaic_0001>
module attributes {stable_mosaic.version = 11 : i64} {
  func.func @kernel(%arg0: i32, %arg1: memref<2x4x256xf32, #tpu.memory_space<vmem>>, %arg2: memref<1x32x2xf32, #tpu.memory_space<vmem>>, %arg3: memref<32x4xf32, #tpu.memory_space<vmem>>, %arg4: memref<1x32xf32, #tpu.memory_space<vmem>>, %arg5: memref<2x4xf32, #tpu.memory_space<vmem>>, %arg6: memref<2x256xf32, #tpu.memory_space<vmem>>) attributes {dimension_semantics = [#tpu.dimension_semantics<parallel>], iteration_bounds = array<i64: 1>, scalar_prefetch = 0 : i64, scratch_operands = 0 : i64, tpu.core_type = #tpu.core_type<tc>, window_params = [{transform_indices = @transform_0, window_bounds = array<i64: 2, 4, 256>}, {transform_indices = @transform_1, window_bounds = array<i64: 1, 32, 2>}, {pipeline_mode = #tpu.pipeline_mode<synchronous>, transform_indices = @transform_2, window_bounds = array<i64: 32, 4>}, {pipeline_mode = #tpu.pipeline_mode<synchronous>, transform_indices = @transform_3, window_bounds = array<i64: 1, 32>}, {transform_indices = @transform_4, window_bounds = array<i64: 2, 4>}, {transform_indices = @transform_5, window_bounds = array<i64: 2, 256>}]} {
    %c0 = arith.constant 0 : index
    %c0_0 = arith.constant 0 : index
    %0 = vector.load %arg3[%c0, %c0_0] : memref<32x4xf32, #tpu.memory_space<vmem>>, vector<32x4xf32>
    %c0_1 = arith.constant 0 : index
    %c0_2 = arith.constant 0 : index
    %1 = vector.load %arg4[%c0_1, %c0_2] : memref<1x32xf32, #tpu.memory_space<vmem>>, vector<1x32xf32>
    %c0_3 = arith.constant 0 : index
    %c0_4 = arith.constant 0 : index
    %c0_5 = arith.constant 0 : index
    %2 = vector.load %arg2[%c0_3, %c0_4, %c0_5] : memref<1x32x2xf32, #tpu.memory_space<vmem>>, vector<1x32x2xf32>
    %3 = vector.shape_cast %2 : vector<1x32x2xf32> to vector<32x2xf32>
    %4 = tpu.iota {dimensions = array<i32: 1>} : vector<32x2xi32>
    %c0_i32 = arith.constant 0 : i32
    %5 = arith.index_cast %c0_i32 : i32 to index
    %c0_6 = arith.constant 0 : index
    %c0_7 = arith.constant 0 : index
    %6 = vector.load %arg1[%5, %c0_6, %c0_7] : memref<2x4x256xf32, #tpu.memory_space<vmem>>, vector<1x4x256xf32>
    %7 = vector.shape_cast %6 : vector<1x4x256xf32> to vector<4x256xf32>
    %8 = vector.broadcast %c0_i32 : i32 to vector<32x2xi32>
    %9 = arith.cmpi eq, %4, %8 : vector<32x2xi32>
    %cst = arith.constant 0.000000e+00 : f32
    %10 = vector.broadcast %cst : f32 to vector<32x2xf32>
    %11 = arith.select %9, %3, %10 : vector<32x2xi1>, vector<32x2xf32>
    %cst_8 = arith.constant dense<0.000000e+00> : vector<32xf32>
    %12 = vector.multi_reduction <add>, %11, %cst_8 [1] : vector<32x2xf32> to vector<32xf32>
    %13 = vector.shape_cast %12 : vector<32xf32> to vector<32x1xf32>
    %cst_9 = arith.constant dense<0.000000e+00> : vector<32x256xf32>
    %14 = tpu.matmul %0, %7, %cst_9 {dimension_numbers = #tpu.dot_dimension_numbers<[1], [0], [0], [1], [0, 0, 1, 1], [], []>} : vector<32x4xf32>, vector<4x256xf32>, vector<32x256xf32> -> vector<32x256xf32>
    %15 = vector.broadcast %13 : vector<32x1xf32> to vector<32x256xf32>
    %16 = arith.addf %14, %15 : vector<32x256xf32>
    %17 = math.tanh %16 : vector<32x256xf32>
    %cst_10 = arith.constant dense<0.000000e+00> : vector<1x256xf32>
    %18 = tpu.matmul %1, %17, %cst_10 {dimension_numbers = #tpu.dot_dimension_numbers<[1], [0], [0], [1], [0, 0, 1, 1], [], []>} : vector<1x32xf32>, vector<32x256xf32>, vector<1x256xf32> -> vector<1x256xf32>
    %cst_11 = arith.constant dense<0xFF800000> : vector<1xf32>
    %19 = vector.multi_reduction <maximumf>, %18, %cst_11 [1] : vector<1x256xf32> to vector<1xf32>
    %20 = vector.shape_cast %19 : vector<1xf32> to vector<1x1xf32>
    %21 = vector.broadcast %20 : vector<1x1xf32> to vector<1x256xf32>
    %22 = arith.subf %18, %21 : vector<1x256xf32>
    %23 = math.exp %22 : vector<1x256xf32>
    %cst_12 = arith.constant dense<0.000000e+00> : vector<1xf32>
    %24 = vector.multi_reduction <add>, %23, %cst_12 [1] : vector<1x256xf32> to vector<1xf32>
    %25 = vector.shape_cast %24 : vector<1xf32> to vector<1x1xf32>
    %26 = tpu.reciprocal %25 {approx = true} : vector<1x1xf32> -> vector<1x1xf32>
    %27 = arith.mulf %25, %26 : vector<1x1xf32>
    %cst_13 = arith.constant 2.000000e+00 : f32
    %28 = vector.broadcast %cst_13 : f32 to vector<1x1xf32>
    %29 = arith.subf %28, %27 : vector<1x1xf32>
    %30 = arith.mulf %26, %29 : vector<1x1xf32>
    %31 = vector.broadcast %30 : vector<1x1xf32> to vector<1x256xf32>
    %32 = arith.mulf %23, %31 : vector<1x256xf32>
    %33 = arith.index_cast %c0_i32 : i32 to index
    %c0_14 = arith.constant 0 : index
    %34 = vector.load %arg6[%33, %c0_14] : memref<2x256xf32, #tpu.memory_space<vmem>>, vector<1x256xf32>
    tpu.vector_store %arg6[%33, %c0_14], %32 {strides = array<i32>} : memref<2x256xf32, #tpu.memory_space<vmem>>, vector<1x256xf32>,
    %cst_15 = arith.constant dense<0.000000e+00> : vector<1x4xf32>
    %35 = tpu.matmul %32, %7, %cst_15 {dimension_numbers = #tpu.dot_dimension_numbers<[1], [1], [0], [0], [0, 0, 1, 0], [], []>} : vector<1x256xf32>, vector<4x256xf32>, vector<1x4xf32> -> vector<1x4xf32>
    %36 = arith.index_cast %c0_i32 : i32 to index
    %c0_16 = arith.constant 0 : index
    %37 = vector.load %arg5[%36, %c0_16] : memref<2x4xf32, #tpu.memory_space<vmem>>, vector<1x4xf32>
    tpu.vector_store %arg5[%36, %c0_16], %35 {strides = array<i32>} : memref<2x4xf32, #tpu.memory_space<vmem>>, vector<1x4xf32>,
    %c1_i32 = arith.constant 1 : i32
    %38 = arith.index_cast %c1_i32 : i32 to index
    %c0_17 = arith.constant 0 : index
    %c0_18 = arith.constant 0 : index
    %39 = vector.load %arg1[%38, %c0_17, %c0_18] : memref<2x4x256xf32, #tpu.memory_space<vmem>>, vector<1x4x256xf32>
    %40 = vector.shape_cast %39 : vector<1x4x256xf32> to vector<4x256xf32>
    %41 = vector.broadcast %c1_i32 : i32 to vector<32x2xi32>
    %42 = arith.cmpi eq, %4, %41 : vector<32x2xi32>
    %cst_19 = arith.constant 0.000000e+00 : f32
    %43 = vector.broadcast %cst_19 : f32 to vector<32x2xf32>
    %44 = arith.select %42, %3, %43 : vector<32x2xi1>, vector<32x2xf32>
    %cst_20 = arith.constant dense<0.000000e+00> : vector<32xf32>
    %45 = vector.multi_reduction <add>, %44, %cst_20 [1] : vector<32x2xf32> to vector<32xf32>
    %46 = vector.shape_cast %45 : vector<32xf32> to vector<32x1xf32>
    %cst_21 = arith.constant dense<0.000000e+00> : vector<32x256xf32>
    %47 = tpu.matmul %0, %40, %cst_21 {dimension_numbers = #tpu.dot_dimension_numbers<[1], [0], [0], [1], [0, 0, 1, 1], [], []>} : vector<32x4xf32>, vector<4x256xf32>, vector<32x256xf32> -> vector<32x256xf32>
    %48 = vector.broadcast %46 : vector<32x1xf32> to vector<32x256xf32>
    %49 = arith.addf %47, %48 : vector<32x256xf32>
    %50 = math.tanh %49 : vector<32x256xf32>
    %cst_22 = arith.constant dense<0.000000e+00> : vector<1x256xf32>
    %51 = tpu.matmul %1, %50, %cst_22 {dimension_numbers = #tpu.dot_dimension_numbers<[1], [0], [0], [1], [0, 0, 1, 1], [], []>} : vector<1x32xf32>, vector<32x256xf32>, vector<1x256xf32> -> vector<1x256xf32>
    %cst_23 = arith.constant dense<0xFF800000> : vector<1xf32>
    %52 = vector.multi_reduction <maximumf>, %51, %cst_23 [1] : vector<1x256xf32> to vector<1xf32>
    %53 = vector.shape_cast %52 : vector<1xf32> to vector<1x1xf32>
    %54 = vector.broadcast %53 : vector<1x1xf32> to vector<1x256xf32>
    %55 = arith.subf %51, %54 : vector<1x256xf32>
    %56 = math.exp %55 : vector<1x256xf32>
    %cst_24 = arith.constant dense<0.000000e+00> : vector<1xf32>
    %57 = vector.multi_reduction <add>, %56, %cst_24 [1] : vector<1x256xf32> to vector<1xf32>
    %58 = vector.shape_cast %57 : vector<1xf32> to vector<1x1xf32>
    %59 = tpu.reciprocal %58 {approx = true} : vector<1x1xf32> -> vector<1x1xf32>
    %60 = arith.mulf %58, %59 : vector<1x1xf32>
    %cst_25 = arith.constant 2.000000e+00 : f32
    %61 = vector.broadcast %cst_25 : f32 to vector<1x1xf32>
    %62 = arith.subf %61, %60 : vector<1x1xf32>
    %63 = arith.mulf %59, %62 : vector<1x1xf32>
    %64 = vector.broadcast %63 : vector<1x1xf32> to vector<1x256xf32>
    %65 = arith.mulf %56, %64 : vector<1x256xf32>
    %66 = arith.index_cast %c1_i32 : i32 to index
    %c0_26 = arith.constant 0 : index
    %67 = vector.load %arg6[%66, %c0_26] : memref<2x256xf32, #tpu.memory_space<vmem>>, vector<1x256xf32>
    tpu.vector_store %arg6[%66, %c0_26], %65 {strides = array<i32>} : memref<2x256xf32, #tpu.memory_space<vmem>>, vector<1x256xf32>,
    %cst_27 = arith.constant dense<0.000000e+00> : vector<1x4xf32>
    %68 = tpu.matmul %65, %40, %cst_27 {dimension_numbers = #tpu.dot_dimension_numbers<[1], [1], [0], [0], [0, 0, 1, 0], [], []>} : vector<1x256xf32>, vector<4x256xf32>, vector<1x4xf32> -> vector<1x4xf32>
    %69 = arith.index_cast %c1_i32 : i32 to index
    %c0_28 = arith.constant 0 : index
    %70 = vector.load %arg5[%69, %c0_28] : memref<2x4xf32, #tpu.memory_space<vmem>>, vector<1x4xf32>
    tpu.vector_store %arg5[%69, %c0_28], %68 {strides = array<i32>} : memref<2x4xf32, #tpu.memory_space<vmem>>, vector<1x4xf32>,
    %c2_i32 = arith.constant 2 : i32
    return
  }
  func.func @transform_0(%arg0: i32) -> (i32, i32, i32) {
    %c0_i32 = arith.constant 0 : i32
    %c0_i32_0 = arith.constant 0 : i32
    %c0_i32_1 = arith.constant 0 : i32
    return %arg0, %c0_i32, %c0_i32_0 : i32, i32, i32
  }
  func.func @transform_1(%arg0: i32) -> (i32, i32, i32) {
    %c0_i32 = arith.constant 0 : i32
    %c0_i32_0 = arith.constant 0 : i32
    %c0_i32_1 = arith.constant 0 : i32
    return %arg0, %c0_i32, %c0_i32_0 : i32, i32, i32
  }
  func.func @transform_2(%arg0: i32) -> (i32, i32) {
    %c0_i32 = arith.constant 0 : i32
    %c0_i32_0 = arith.constant 0 : i32
    %c0_i32_1 = arith.constant 0 : i32
    return %c0_i32, %c0_i32_0 : i32, i32
  }
  func.func @transform_3(%arg0: i32) -> (i32, i32) {
    %c0_i32 = arith.constant 0 : i32
    %c0_i32_0 = arith.constant 0 : i32
    %c0_i32_1 = arith.constant 0 : i32
    return %c0_i32, %c0_i32_0 : i32, i32
  }
  func.func @transform_4(%arg0: i32) -> (i32, i32) {
    %c0_i32 = arith.constant 0 : i32
    %c0_i32_0 = arith.constant 0 : i32
    return %arg0, %c0_i32 : i32, i32
  }
  func.func @transform_5(%arg0: i32) -> (i32, i32) {
    %c0_i32 = arith.constant 0 : i32
    %c0_i32_0 = arith.constant 0 : i32
    return %arg0, %c0_i32 : i32, i32
  }
}

</mosaic_0001>

<llo_original>
// kernel: tpu_custom_call.1
$region0: #{tpu_custom_call.1}
  #allocation0 [shape = 'u32[]', space=smem, size = 0x4, offset = 0x4, fixed_abs, tag = 'smem constant byte address 0x4 - core index']
  #allocation1 [shape = 'u32[144,128]{1,0:T(1,128)}', space=vmem, size = 0x12000, scoped, tag = 'internal scratch']
  %s0 = inlined_call_operand.vmem [shape: f32[2,4,256], index: 0, kind: input, shape index: {}]
  %s1 = inlined_call_operand.vmem [shape: f32[1,32,2], index: 1, kind: input, shape index: {}]
  %s2 = inlined_call_operand.vmem [shape: f32[32,4], index: 2, kind: input, shape index: {}]
  %s3 = inlined_call_operand.vmem [shape: f32[1,32], index: 3, kind: input, shape index: {}]
  %s4 = inlined_call_operand.hbm [shape: f32[2,4], index: 4, kind: output, shape index: {0}]
  %s5 = inlined_call_operand.hbm [shape: f32[2,256], index: 5, kind: output, shape index: {1}]
  %6 = xla_tuple %s4, %s5
  %s7 = sld [smem:[#allocation0]]
  $region34: #{tpu_custom_call.1} parent=0
    _
  %s9 = ssub.s32 1, %s7
  %s10 = scalar_select 0, %s9, %s7
  $region1: #{tpu_custom_call.1} parent=0
    #allocation2 [shape = 'u8[1024]{0}', space=vmem, size = 0x400, scoped, tag = 'output window, operand 0, single buffered']
    #allocation3 [shape = 's32[1]{0}', space=sflag, size = 0x4, scoped, tag = 'scoped memory for tpu_custom_call.1']
    #allocation4 [shape = 'u8[2048]{0}', space=vmem, size = 0x800, scoped, tag = 'output window, operand 1, single buffered']
    #allocation5 [shape = 's32[1]{0}', space=sflag, size = 0x4, scoped, tag = 'scoped memory for tpu_custom_call.1']
    %11 = vsyncpa [#allocation3], 0
    %12 = vsyncpa [#allocation5], 0
    // Predicated region
    $region2: #{tpu_custom_call.1} parent=1 // pred_check
      _
    $region3: #{tpu_custom_call.1} parent=1 // pred_check_branch
      %14 = sbr.rel (0) target = $region5
    $region4: #{tpu_custom_call.1} parent=1 // pred_region
      _
    $region5: #{tpu_custom_call.1} parent=1 // pred_fallthru
      _
    // Predicated region
    $region6: #{tpu_custom_call.1} parent=1 // pred_check
      _
    $region7: #{tpu_custom_call.1} parent=1 // pred_check_branch
      %16 = sbr.rel (0) target = $region9
    $region8: #{tpu_custom_call.1} parent=1 // pred_region
      _
    $region9: #{tpu_custom_call.1} parent=1 // pred_fallthru
      _
    // Predicated region
    $region10: #{tpu_custom_call.1} parent=1 // pred_check
      _
    $region11: #{tpu_custom_call.1} parent=1 // pred_check_branch
      %18 = sbr.rel (0) target = $region13
    $region12: #{tpu_custom_call.1} parent=1 // pred_region
      _
    $region13: #{tpu_custom_call.1} parent=1 // pred_fallthru
      _
    // Predicated region
    $region14: #{tpu_custom_call.1} parent=1 // pred_check
      _
    $region15: #{tpu_custom_call.1} parent=1 // pred_check_branch
      %20 = sbr.rel (0) target = $region17
    $region16: #{tpu_custom_call.1} parent=1 // pred_region
      _
    $region17: #{tpu_custom_call.1} parent=1 // pred_fallthru
      _
    %v21 = vld [vmem:[%s2] sm:$0xff]
    %v22 = vld [vmem:[%s2 + $0x8] sm:$0xff]
    %v23 = vld [vmem:[%s2 + $0x10] sm:$0xff]
    %v24 = vld [vmem:[%s2 + $0x18] sm:$0xff]
    %v25 = vld [vmem:[%s3] sm:$0x1]
    %v26 = vld [vmem:[%s1] sm:$0xff]
    %v27 = vld [vmem:[%s1 + $0x8] sm:$0xff]
    %v28 = vld [vmem:[%s1 + $0x10] sm:$0xff]
    %v29 = vld [vmem:[%s1 + $0x18] sm:$0xff]
    %v30 = vlaneseq
    %v31 = vand.u32 %v30, 127
    %v32 = vld [vmem:[%s0] sm:$0xff]
    %vm33 = vcmp.eq.s32.totalorder %v31, 0
    %v34 = vsel %vm33, %v26, 0.0
    %v35 = vsel %vm33, %v27, 0.0
    %v36 = vsel %vm33, %v28, 0.0
    %v37 = vsel %vm33, %v29, 0.0
    %vm38 = vcmask 15360
    %v39 = vsel %vm38, %v34, 0.0
    %40 = vadd.xlane.f32.xlu0 %v39
    %v41 = vpop.xlane.xlu0 %40
    %v42 = vsel %vm38, %v35, 0.0
    %43 = vadd.xlane.f32.xlu0 %v42
    %v44 = vpop.xlane.xlu0 %43
    %v45 = vsel %vm38, %v36, 0.0
    %46 = vadd.xlane.f32.xlu0 %v45
    %v47 = vpop.xlane.xlu0 %46
    %v48 = vsel %vm38, %v37, 0.0
    %49 = vadd.xlane.f32.xlu0 %v48
    %v50 = vpop.xlane.xlu0 %49
    %v52 = vcombine.high %v32, %v32
    %vm53 = vcmask 31744
    %v55 = vsel %vm53, %v21, 0
    %v58 = vsel %vm53, %v22, 0
    %v61 = vsel %vm53, %v23, 0
    %v64 = vsel %vm53, %v24, 0
    %vm66 = vcmask 1043456
    %v67 = vsel %vm66, %v32, 0
    %v69 = vsel %vm66, %v52, 0
    %71 = vmatprep.subr.mxu0 %v69
    %72 = vmatpush1.msra.mxu0 %v67
    %73 = vmatprep.subr.mxu0 0.0
    %74 = vmatpush1.msra.mxu0 0.0
    %75 = vmatprep.subr.mxu0 0.0
    %76 = vmatpush1.msra.mxu0 0.0
    %77 = vmatprep.subr.mxu0 0.0
    %78 = vmatpush1.msra.mxu0 0.0
    %79 = vmatprep.subr.mxu0 0.0
    %80 = vmatpush1.msra.mxu0 0.0
    %81 = vmatprep.subr.mxu0 0.0
    %82 = vmatpush1.msra.mxu0 0.0
    %83 = vmatprep.subr.mxu0 0.0
    %84 = vmatpush1.msra.mxu0 0.0
    %85 = vmatprep.subr.mxu0 0.0
    %86 = vmatpush1.msra.mxu0 0.0
    %87 = vmatprep.subr.mxu0 0.0
    %88 = vmatpush1.msra.mxu0 0.0
    %89 = vmatprep.subr.mxu0 0.0
    %90 = vmatpush1.msra.mxu0 0.0
    %91 = vmatprep.subr.mxu0 0.0
    %92 = vmatpush1.msra.mxu0 0.0
    %93 = vmatprep.subr.mxu0 0.0
    %94 = vmatpush1.msra.mxu0 0.0
    %95 = vmatprep.subr.mxu0 0.0
    %96 = vmatpush1.msra.mxu0 0.0
    %97 = vmatprep.subr.mxu0 0.0
    %98 = vmatpush1.msra.mxu0 0.0
    %99 = vmatprep.subr.mxu0 0.0
    %100 = vmatpush1.msra.mxu0 0.0
    %101 = vmatprep.subr.mxu0 0.0
    %102 = vmatpush1.msra.mxu0 0.0
    %103 = vmatprep.subr.mxu0 0.0
    %104 = vmatpush1.msra.mxu0 0.0
    %105 = vmatprep.subr.mxu0 0.0
    %106 = vmatpush1.msra.mxu0 0.0
    %107 = vmatprep.subr.mxu0 0.0
    %108 = vmatpush1.msra.mxu0 0.0
    %109 = vmatprep.subr.mxu0 0.0
    %110 = vmatpush1.msra.mxu0 0.0
    %111 = vmatprep.subr.mxu0 0.0
    %112 = vmatpush1.msra.mxu0 0.0
    %113 = vmatprep.subr.mxu0 0.0
    %114 = vmatpush1.msra.mxu0 0.0
    %115 = vmatprep.subr.mxu0 0.0
    %116 = vmatpush1.msra.mxu0 0.0
    %117 = vmatprep.subr.mxu0 0.0
    %118 = vmatpush1.msra.mxu0 0.0
    %119 = vmatprep.subr.mxu0 0.0
    %120 = vmatpush1.msra.mxu0 0.0
    %121 = vmatprep.subr.mxu0 0.0
    %122 = vmatpush1.msra.mxu0 0.0
    %123 = vmatprep.subr.mxu0 0.0
    %124 = vmatpush1.msra.mxu0 0.0
    %125 = vmatprep.subr.mxu0 0.0
    %126 = vmatpush1.msra.mxu0 0.0
    %127 = vmatprep.subr.mxu0 0.0
    %128 = vmatpush1.msra.mxu0 0.0
    %129 = vmatprep.subr.mxu0 0.0
    %130 = vmatpush1.msra.mxu0 0.0
    %131 = vmatprep.subr.mxu0 0.0
    %132 = vmatpush1.msra.mxu0 0.0
    %133 = vmatprep.subr.mxu0 0.0
    %134 = vmatpush1.msra.mxu0 0.0
    %135 = vmatprep.mubr.f32.mxu0 0.0
    %136 = vmatmul.mubr.f32.gmra.mrb[0].mxu0 %v55
    %v137 = vpop.f32.mrb[0].mxu0
    %v138 = vadd.f32 %v41, %v137
    %v139 = vpop.f32.mrb[0].mxu0
    %v140 = vadd.f32 %v41, %v139
    %141 = vmatprep.mubr.f32.mxu0 0.0
    %142 = vmatmul.mubr.f32.gmra.mrb[0].mxu0 %v58
    %v143 = vpop.f32.mrb[0].mxu0
    %v144 = vadd.f32 %v44, %v143
    %v145 = vpop.f32.mrb[0].mxu0
    %v146 = vadd.f32 %v44, %v145
    %147 = vmatprep.mubr.f32.mxu0 0.0
    %148 = vmatmul.mubr.f32.gmra.mrb[0].mxu0 %v61
    %v149 = vpop.f32.mrb[0].mxu0
    %v150 = vadd.f32 %v47, %v149
    %v151 = vpop.f32.mrb[0].mxu0
    %v152 = vadd.f32 %v47, %v151
    %153 = vmatprep.mubr.f32.mxu0 0.0
    %154 = vmatmul.mubr.f32.gmra.mrb[0].mxu0 %v64
    %v155 = vpop.f32.mrb[0].mxu0
    %v156 = vadd.f32 %v50, %v155
    %v157 = vpop.f32.mrb[0].mxu0
    %v158 = vadd.f32 %v50, %v157
    %159 = vdwg.mxu0
    %v160 = vtanh.pop %v138
    %v161 = vtanh.pop %v140
    %v162 = vtanh.pop %v144
    %v163 = vtanh.pop %v146
    %v164 = vtanh.pop %v150
    %v165 = vtanh.pop %v152
    %v166 = vtanh.pop %v156
    %v167 = vtanh.pop %v158
    %vm168 = vcmask 261120
    %v170 = vsel %vm168, %v25, 0
    %172 = vmatprep.subr.mxu0 %v161
    %173 = vmatpush1.msra.mxu0 %v160
    %174 = vmatprep.subr.mxu0 %v163
    %175 = vmatpush1.msra.mxu0 %v162
    %176 = vmatprep.subr.mxu0 %v165
    %177 = vmatpush1.msra.mxu0 %v164
    %178 = vmatprep.subr.mxu0 %v167
    %179 = vmatpush1.msra.mxu0 %v166
    %180 = vmatprep.subr.mxu0 0.0
    %181 = vmatpush1.msra.mxu0 0.0
    %182 = vmatprep.subr.mxu0 0.0
    %183 = vmatpush1.msra.mxu0 0.0
    %184 = vmatprep.subr.mxu0 0.0
    %185 = vmatpush1.msra.mxu0 0.0
    %186 = vmatprep.subr.mxu0 0.0
    %187 = vmatpush1.msra.mxu0 0.0
    %188 = vmatprep.subr.mxu0 0.0
    %189 = vmatpush1.msra.mxu0 0.0
    %190 = vmatprep.subr.mxu0 0.0
    %191 = vmatpush1.msra.mxu0 0.0
    %192 = vmatprep.subr.mxu0 0.0
    %193 = vmatpush1.msra.mxu0 0.0
    %194 = vmatprep.subr.mxu0 0.0
    %195 = vmatpush1.msra.mxu0 0.0
    %196 = vmatprep.subr.mxu0 0.0
    %197 = vmatpush1.msra.mxu0 0.0
    %198 = vmatprep.subr.mxu0 0.0
    %199 = vmatpush1.msra.mxu0 0.0
    %200 = vmatprep.subr.mxu0 0.0
    %201 = vmatpush1.msra.mxu0 0.0
    %202 = vmatprep.subr.mxu0 0.0
    %203 = vmatpush1.msra.mxu0 0.0
    %204 = vmatprep.subr.mxu0 0.0
    %205 = vmatpush1.msra.mxu0 0.0
    %206 = vmatprep.subr.mxu0 0.0
    %207 = vmatpush1.msra.mxu0 0.0
    %208 = vmatprep.subr.mxu0 0.0
    %209 = vmatpush1.msra.mxu0 0.0
    %210 = vmatprep.subr.mxu0 0.0
    %211 = vmatpush1.msra.mxu0 0.0
    %212 = vmatprep.subr.mxu0 0.0
    %213 = vmatpush1.msra.mxu0 0.0
    %214 = vmatprep.subr.mxu0 0.0
    %215 = vmatpush1.msra.mxu0 0.0
    %216 = vmatprep.subr.mxu0 0.0
    %217 = vmatpush1.msra.mxu0 0.0
    %218 = vmatprep.subr.mxu0 0.0
    %219 = vmatpush1.msra.mxu0 0.0
    %220 = vmatprep.subr.mxu0 0.0
    %221 = vmatpush1.msra.mxu0 0.0
    %222 = vmatprep.subr.mxu0 0.0
    %223 = vmatpush1.msra.mxu0 0.0
    %224 = vmatprep.subr.mxu0 0.0
    %225 = vmatpush1.msra.mxu0 0.0
    %226 = vmatprep.subr.mxu0 0.0
    %227 = vmatpush1.msra.mxu0 0.0
    %228 = vmatprep.subr.mxu0 0.0
    %229 = vmatpush1.msra.mxu0 0.0
    %230 = vmatprep.subr.mxu0 0.0
    %231 = vmatpush1.msra.mxu0 0.0
    %232 = vmatprep.subr.mxu0 0.0
    %233 = vmatpush1.msra.mxu0 0.0
    %234 = vmatprep.subr.mxu0 0.0
    %235 = vmatpush1.msra.mxu0 0.0
    %236 = vmatprep.mubr.f32.mxu0 0.0
    %237 = vmatmul.mubr.f32.gmra.mrb[0].mxu0 %v170
    %v238 = vpop.f32.mrb[0].mxu0
    %v239 = vadd.f32 0.0, %v238
    %v240 = vpop.f32.mrb[0].mxu0
    %v241 = vadd.f32 0.0, %v240
    %242 = vdwg.mxu0
    %vm243 = vcmask 1040384
    %v244 = vsel %vm243, %v239, -inf
    %v245 = vsel %vm243, %v241, -inf
    %v246 = vmax.f32 %v244, %v245
    %247 = vmax.xlane.f32.xlu0 %v246
    %v248 = vpop.xlane.xlu0 %247
    %v249 = vsub.f32 %v239, %v248
    %v250 = vsub.f32 %v241, %v248
    %v251 = vmul.f32 %v249, 1.442695
    %v252 = vpow.pop %v251
    %v253 = vmul.f32 %v250, 1.442695
    %v254 = vpow.pop %v253
    %v255 = vsel %vm243, %v252, 0.0
    %v256 = vsel %vm243, %v254, 0.0
    %v257 = vadd.f32 %v255, %v256
    %258 = vadd.xlane.f32.xlu0 %v257
    %v259 = vpop.xlane.xlu0 %258
    %v260 = vrcp.pop %v259
    %v261 = vmul.f32 %v259, %v260
    %v262 = vsub.f32 2.0, %v261
    %v263 = vmul.f32 %v260, %v262
    %v264 = vmul.f32 %v252, %v263
    %v265 = vmul.f32 %v254, %v263
    %v268 = vcombine.low %v264, %v265
    %v270 = vunpack.c.l.s4 1966171168
    %v271 = vunpack.c.0.s8 %v270
    %v272 = vlaneseq
    %v273 = vshrl.u32 %v272, 7
    %v274 = vsub.s32 %v271, %v273
    %v275 = vrot.slane %v268, %v274
    %v277 = vunpack.c.l.s4 1966171168
    %v278 = vunpack.c.0.s8 %v277
    %v279 = vlaneseq
    %v280 = vshrl.u32 %v279, 7
    %v281 = vsub.s32 %v278, %v280
    %v282 = vrot.slane %v275, %v281
    %v284 = vlaneseq
    %vm285 = vcmp.ge.s32.totalorder %v284, 0
    %vm286 = vcmp.lt.s32.totalorder %v284, 256
    %vm287 = vmand %vm285, %vm286
    %288 = vst.msk [vmem:[#allocation4] ss:$2 sm:$0x3] %vm287, %v282
    %290 = vmatprep.subr.mxu0 %v52
    %291 = vmatpush1.xpose.msra.mxu0 %v32
    %292 = vmatprep.subr.mxu0 0.0
    %293 = vmatpush1.xpose.msra.mxu0 0.0
    %294 = vmatprep.subr.mxu0 0.0
    %295 = vmatpush1.xpose.msra.mxu0 0.0
    %296 = vmatprep.subr.mxu0 0.0
    %297 = vmatpush1.xpose.msra.mxu0 0.0
    %298 = vmatprep.subr.mxu0 0.0
    %299 = vmatpush1.xpose.msra.mxu0 0.0
    %300 = vmatprep.subr.mxu0 0.0
    %301 = vmatpush1.xpose.msra.mxu0 0.0
    %302 = vmatprep.subr.mxu0 0.0
    %303 = vmatpush1.xpose.msra.mxu0 0.0
    %304 = vmatprep.subr.mxu0 0.0
    %305 = vmatpush1.xpose.msra.mxu0 0.0
    %306 = vmatprep.subr.mxu0 0.0
    %307 = vmatpush1.xpose.msra.mxu0 0.0
    %308 = vmatprep.subr.mxu0 0.0
    %309 = vmatpush1.xpose.msra.mxu0 0.0
    %310 = vmatprep.subr.mxu0 0.0
    %311 = vmatpush1.xpose.msra.mxu0 0.0
    %312 = vmatprep.subr.mxu0 0.0
    %313 = vmatpush1.xpose.msra.mxu0 0.0
    %314 = vmatprep.subr.mxu0 0.0
    %315 = vmatpush1.xpose.msra.mxu0 0.0
    %316 = vmatprep.subr.mxu0 0.0
    %317 = vmatpush1.xpose.msra.mxu0 0.0
    %318 = vmatprep.subr.mxu0 0.0
    %319 = vmatpush1.xpose.msra.mxu0 0.0
    %320 = vmatprep.subr.mxu0 0.0
    %321 = vmatpush1.xpose.msra.mxu0 0.0
    %322 = vmatprep.subr.mxu0 0.0
    %323 = vmatpush1.xpose.msra.mxu0 0.0
    %324 = vmatprep.subr.mxu0 0.0
    %325 = vmatpush1.xpose.msra.mxu0 0.0
    %326 = vmatprep.subr.mxu0 0.0
    %327 = vmatpush1.xpose.msra.mxu0 0.0
    %328 = vmatprep.subr.mxu0 0.0
    %329 = vmatpush1.xpose.msra.mxu0 0.0
    %330 = vmatprep.subr.mxu0 0.0
    %331 = vmatpush1.xpose.msra.mxu0 0.0
    %332 = vmatprep.subr.mxu0 0.0
    %333 = vmatpush1.xpose.msra.mxu0 0.0
    %334 = vmatprep.subr.mxu0 0.0
    %335 = vmatpush1.xpose.msra.mxu0 0.0
    %336 = vmatprep.subr.mxu0 0.0
    %337 = vmatpush1.xpose.msra.mxu0 0.0
    %338 = vmatprep.subr.mxu0 0.0
    %339 = vmatpush1.xpose.msra.mxu0 0.0
    %340 = vmatprep.subr.mxu0 0.0
    %341 = vmatpush1.xpose.msra.mxu0 0.0
    %342 = vmatprep.subr.mxu0 0.0
    %343 = vmatpush1.xpose.msra.mxu0 0.0
    %344 = vmatprep.subr.mxu0 0.0
    %345 = vmatpush1.xpose.msra.mxu0 0.0
    %346 = vmatprep.subr.mxu0 0.0
    %347 = vmatpush1.xpose.msra.mxu0 0.0
    %348 = vmatprep.subr.mxu0 0.0
    %349 = vmatpush1.xpose.msra.mxu0 0.0
    %350 = vmatprep.subr.mxu0 0.0
    %351 = vmatpush1.xpose.msra.mxu0 0.0
    %352 = vmatprep.subr.mxu0 0.0
    %353 = vmatpush1.xpose.msra.mxu0 0.0
    %354 = vmatprep.mubr.f32.mxu0 %v265
    %355 = vmatmul.mubr.f32.gmra.mrb[0].mxu0 %v264
    %v356 = vpop.f32.mrb[0].mxu0
    %v357 = vadd.f32 0.0, %v356
    %v358 = vpop.f32.mrb[0].mxu0
    %359 = vdwg.mxu0
    %vm360 = vcmask 24576
    %361 = vst.msk [vmem:[#allocation2] sm:$0x1] %vm360, %v357
    %s362 = scalar_lea.vmem %s0, 8
    %v363 = vld [vmem:[%s362] sm:$0xff]
    %vm364 = vcmp.eq.s32.totalorder %v31, 1
    %v365 = vsel %vm364, %v26, 0.0
    %v366 = vsel %vm364, %v27, 0.0
    %v367 = vsel %vm364, %v28, 0.0
    %v368 = vsel %vm364, %v29, 0.0
    %v369 = vsel %vm38, %v365, 0.0
    %370 = vadd.xlane.f32.xlu0 %v369
    %v371 = vpop.xlane.xlu0 %370
    %v372 = vsel %vm38, %v366, 0.0
    %373 = vadd.xlane.f32.xlu0 %v372
    %v374 = vpop.xlane.xlu0 %373
    %v375 = vsel %vm38, %v367, 0.0
    %376 = vadd.xlane.f32.xlu0 %v375
    %v377 = vpop.xlane.xlu0 %376
    %v378 = vsel %vm38, %v368, 0.0
    %379 = vadd.xlane.f32.xlu0 %v378
    %v380 = vpop.xlane.xlu0 %379
    %v382 = vcombine.high %v363, %v363
    %v383 = vsel %vm66, %v363, 0
    %v385 = vsel %vm66, %v382, 0
    %387 = vmatprep.subr.mxu0 %v385
    %388 = vmatpush1.msra.mxu0 %v383
    %389 = vmatprep.subr.mxu0 0.0
    %390 = vmatpush1.msra.mxu0 0.0
    %391 = vmatprep.subr.mxu0 0.0
    %392 = vmatpush1.msra.mxu0 0.0
    %393 = vmatprep.subr.mxu0 0.0
    %394 = vmatpush1.msra.mxu0 0.0
    %395 = vmatprep.subr.mxu0 0.0
    %396 = vmatpush1.msra.mxu0 0.0
    %397 = vmatprep.subr.mxu0 0.0
    %398 = vmatpush1.msra.mxu0 0.0
    %399 = vmatprep.subr.mxu0 0.0
    %400 = vmatpush1.msra.mxu0 0.0
    %401 = vmatprep.subr.mxu0 0.0
    %402 = vmatpush1.msra.mxu0 0.0
    %403 = vmatprep.subr.mxu0 0.0
    %404 = vmatpush1.msra.mxu0 0.0
    %405 = vmatprep.subr.mxu0 0.0
    %406 = vmatpush1.msra.mxu0 0.0
    %407 = vmatprep.subr.mxu0 0.0
    %408 = vmatpush1.msra.mxu0 0.0
    %409 = vmatprep.subr.mxu0 0.0
    %410 = vmatpush1.msra.mxu0 0.0
    %411 = vmatprep.subr.mxu0 0.0
    %412 = vmatpush1.msra.mxu0 0.0
    %413 = vmatprep.subr.mxu0 0.0
    %414 = vmatpush1.msra.mxu0 0.0
    %415 = vmatprep.subr.mxu0 0.0
    %416 = vmatpush1.msra.mxu0 0.0
    %417 = vmatprep.subr.mxu0 0.0
    %418 = vmatpush1.msra.mxu0 0.0
    %419 = vmatprep.subr.mxu0 0.0
    %420 = vmatpush1.msra.mxu0 0.0
    %421 = vmatprep.subr.mxu0 0.0
    %422 = vmatpush1.msra.mxu0 0.0
    %423 = vmatprep.subr.mxu0 0.0
    %424 = vmatpush1.msra.mxu0 0.0
    %425 = vmatprep.subr.mxu0 0.0
    %426 = vmatpush1.msra.mxu0 0.0
    %427 = vmatprep.subr.mxu0 0.0
    %428 = vmatpush1.msra.mxu0 0.0
    %429 = vmatprep.subr.mxu0 0.0
    %430 = vmatpush1.msra.mxu0 0.0
    %431 = vmatprep.subr.mxu0 0.0
    %432 = vmatpush1.msra.mxu0 0.0
    %433 = vmatprep.subr.mxu0 0.0
    %434 = vmatpush1.msra.mxu0 0.0
    %435 = vmatprep.subr.mxu0 0.0
    %436 = vmatpush1.msra.mxu0 0.0
    %437 = vmatprep.subr.mxu0 0.0
    %438 = vmatpush1.msra.mxu0 0.0
    %439 = vmatprep.subr.mxu0 0.0
    %440 = vmatpush1.msra.mxu0 0.0
    %441 = vmatprep.subr.mxu0 0.0
    %442 = vmatpush1.msra.mxu0 0.0
    %443 = vmatprep.subr.mxu0 0.0
    %444 = vmatpush1.msra.mxu0 0.0
    %445 = vmatprep.subr.mxu0 0.0
    %446 = vmatpush1.msra.mxu0 0.0
    %447 = vmatprep.subr.mxu0 0.0
    %448 = vmatpush1.msra.mxu0 0.0
    %449 = vmatprep.subr.mxu0 0.0
    %450 = vmatpush1.msra.mxu0 0.0
    %451 = vmatprep.mubr.f32.mxu0 0.0
    %452 = vmatmul.mubr.f32.gmra.mrb[0].mxu0 %v55
    %v453 = vpop.f32.mrb[0].mxu0
    %v454 = vadd.f32 %v371, %v453
    %v455 = vpop.f32.mrb[0].mxu0
    %v456 = vadd.f32 %v371, %v455
    %457 = vmatprep.mubr.f32.mxu0 0.0
    %458 = vmatmul.mubr.f32.gmra.mrb[0].mxu0 %v58
    %v459 = vpop.f32.mrb[0].mxu0
    %v460 = vadd.f32 %v374, %v459
    %v461 = vpop.f32.mrb[0].mxu0
    %v462 = vadd.f32 %v374, %v461
    %463 = vmatprep.mubr.f32.mxu0 0.0
    %464 = vmatmul.mubr.f32.gmra.mrb[0].mxu0 %v61
    %v465 = vpop.f32.mrb[0].mxu0
    %v466 = vadd.f32 %v377, %v465
    %v467 = vpop.f32.mrb[0].mxu0
    %v468 = vadd.f32 %v377, %v467
    %469 = vmatprep.mubr.f32.mxu0 0.0
    %470 = vmatmul.mubr.f32.gmra.mrb[0].mxu0 %v64
    %v471 = vpop.f32.mrb[0].mxu0
    %v472 = vadd.f32 %v380, %v471
    %v473 = vpop.f32.mrb[0].mxu0
    %v474 = vadd.f32 %v380, %v473
    %475 = vdwg.mxu0
    %v476 = vtanh.pop %v454
    %v477 = vtanh.pop %v456
    %v478 = vtanh.pop %v460
    %v479 = vtanh.pop %v462
    %v480 = vtanh.pop %v466
    %v481 = vtanh.pop %v468
    %v482 = vtanh.pop %v472
    %v483 = vtanh.pop %v474
    %484 = vmatprep.subr.mxu0 %v477
    %485 = vmatpush1.msra.mxu0 %v476
    %486 = vmatprep.subr.mxu0 %v479
    %487 = vmatpush1.msra.mxu0 %v478
    %488 = vmatprep.subr.mxu0 %v481
    %489 = vmatpush1.msra.mxu0 %v480
    %490 = vmatprep.subr.mxu0 %v483
    %491 = vmatpush1.msra.mxu0 %v482
    %492 = vmatprep.subr.mxu0 0.0
    %493 = vmatpush1.msra.mxu0 0.0
    %494 = vmatprep.subr.mxu0 0.0
    %495 = vmatpush1.msra.mxu0 0.0
    %496 = vmatprep.subr.mxu0 0.0
    %497 = vmatpush1.msra.mxu0 0.0
    %498 = vmatprep.subr.mxu0 0.0
    %499 = vmatpush1.msra.mxu0 0.0
    %500 = vmatprep.subr.mxu0 0.0
    %501 = vmatpush1.msra.mxu0 0.0
    %502 = vmatprep.subr.mxu0 0.0
    %503 = vmatpush1.msra.mxu0 0.0
    %504 = vmatprep.subr.mxu0 0.0
    %505 = vmatpush1.msra.mxu0 0.0
    %506 = vmatprep.subr.mxu0 0.0
    %507 = vmatpush1.msra.mxu0 0.0
    %508 = vmatprep.subr.mxu0 0.0
    %509 = vmatpush1.msra.mxu0 0.0
    %510 = vmatprep.subr.mxu0 0.0
    %511 = vmatpush1.msra.mxu0 0.0
    %512 = vmatprep.subr.mxu0 0.0
    %513 = vmatpush1.msra.mxu0 0.0
    %514 = vmatprep.subr.mxu0 0.0
    %515 = vmatpush1.msra.mxu0 0.0
    %516 = vmatprep.subr.mxu0 0.0
    %517 = vmatpush1.msra.mxu0 0.0
    %518 = vmatprep.subr.mxu0 0.0
    %519 = vmatpush1.msra.mxu0 0.0
    %520 = vmatprep.subr.mxu0 0.0
    %521 = vmatpush1.msra.mxu0 0.0
    %522 = vmatprep.subr.mxu0 0.0
    %523 = vmatpush1.msra.mxu0 0.0
    %524 = vmatprep.subr.mxu0 0.0
    %525 = vmatpush1.msra.mxu0 0.0
    %526 = vmatprep.subr.mxu0 0.0
    %527 = vmatpush1.msra.mxu0 0.0
    %528 = vmatprep.subr.mxu0 0.0
    %529 = vmatpush1.msra.mxu0 0.0
    %530 = vmatprep.subr.mxu0 0.0
    %531 = vmatpush1.msra.mxu0 0.0
    %532 = vmatprep.subr.mxu0 0.0
    %533 = vmatpush1.msra.mxu0 0.0
    %534 = vmatprep.subr.mxu0 0.0
    %535 = vmatpush1.msra.mxu0 0.0
    %536 = vmatprep.subr.mxu0 0.0
    %537 = vmatpush1.msra.mxu0 0.0
    %538 = vmatprep.subr.mxu0 0.0
    %539 = vmatpush1.msra.mxu0 0.0
    %540 = vmatprep.subr.mxu0 0.0
    %541 = vmatpush1.msra.mxu0 0.0
    %542 = vmatprep.subr.mxu0 0.0
    %543 = vmatpush1.msra.mxu0 0.0
    %544 = vmatprep.subr.mxu0 0.0
    %545 = vmatpush1.msra.mxu0 0.0
    %546 = vmatprep.subr.mxu0 0.0
    %547 = vmatpush1.msra.mxu0 0.0
    %548 = vmatprep.mubr.f32.mxu0 0.0
    %549 = vmatmul.mubr.f32.gmra.mrb[0].mxu0 %v170
    %v550 = vpop.f32.mrb[0].mxu0
    %v551 = vadd.f32 0.0, %v550
    %v552 = vpop.f32.mrb[0].mxu0
    %v553 = vadd.f32 0.0, %v552
    %554 = vdwg.mxu0
    %v555 = vsel %vm243, %v551, -inf
    %v556 = vsel %vm243, %v553, -inf
    %v557 = vmax.f32 %v555, %v556
    %558 = vmax.xlane.f32.xlu0 %v557
    %v559 = vpop.xlane.xlu0 %558
    %v560 = vsub.f32 %v551, %v559
    %v561 = vsub.f32 %v553, %v559
    %v562 = vmul.f32 %v560, 1.442695
    %v563 = vpow.pop %v562
    %v564 = vmul.f32 %v561, 1.442695
    %v565 = vpow.pop %v564
    %v566 = vsel %vm243, %v563, 0.0
    %v567 = vsel %vm243, %v565, 0.0
    %v568 = vadd.f32 %v566, %v567
    %569 = vadd.xlane.f32.xlu0 %v568
    %v570 = vpop.xlane.xlu0 %569
    %v571 = vrcp.pop %v570
    %v572 = vmul.f32 %v570, %v571
    %v573 = vsub.f32 2.0, %v572
    %v574 = vmul.f32 %v571, %v573
    %v575 = vmul.f32 %v563, %v574
    %v576 = vmul.f32 %v565, %v574
    %v579 = vcombine.low %v575, %v576
    %v581 = vunpack.c.l.s4 1966171168
    %v582 = vunpack.c.0.s8 %v581
    %v583 = vlaneseq
    %v584 = vshrl.u32 %v583, 7
    %v585 = vsub.s32 %v582, %v584
    %v586 = vrot.slane %v579, %v585
    %v588 = vunpack.c.l.s4 1966171168
    %v589 = vunpack.c.0.s8 %v588
    %v590 = vlaneseq
    %v591 = vshrl.u32 %v590, 7
    %v592 = vsub.s32 %v589, %v591
    %v593 = vrot.slane %v586, %v592
    %s595 = scalar_lea.vmem [#allocation4], 1
    %596 = vst.msk [vmem:[%s595] ss:$2 sm:$0x3] %vm287, %v593
    %598 = vmatprep.subr.mxu0 %v382
    %599 = vmatpush1.xpose.msra.mxu0 %v363
    %600 = vmatprep.subr.mxu0 0.0
    %601 = vmatpush1.xpose.msra.mxu0 0.0
    %602 = vmatprep.subr.mxu0 0.0
    %603 = vmatpush1.xpose.msra.mxu0 0.0
    %604 = vmatprep.subr.mxu0 0.0
    %605 = vmatpush1.xpose.msra.mxu0 0.0
    %606 = vmatprep.subr.mxu0 0.0
    %607 = vmatpush1.xpose.msra.mxu0 0.0
    %608 = vmatprep.subr.mxu0 0.0
    %609 = vmatpush1.xpose.msra.mxu0 0.0
    %610 = vmatprep.subr.mxu0 0.0
    %611 = vmatpush1.xpose.msra.mxu0 0.0
    %612 = vmatprep.subr.mxu0 0.0
    %613 = vmatpush1.xpose.msra.mxu0 0.0
    %614 = vmatprep.subr.mxu0 0.0
    %615 = vmatpush1.xpose.msra.mxu0 0.0
    %616 = vmatprep.subr.mxu0 0.0
    %617 = vmatpush1.xpose.msra.mxu0 0.0
    %618 = vmatprep.subr.mxu0 0.0
    %619 = vmatpush1.xpose.msra.mxu0 0.0
    %620 = vmatprep.subr.mxu0 0.0
    %621 = vmatpush1.xpose.msra.mxu0 0.0
    %622 = vmatprep.subr.mxu0 0.0
    %623 = vmatpush1.xpose.msra.mxu0 0.0
    %624 = vmatprep.subr.mxu0 0.0
    %625 = vmatpush1.xpose.msra.mxu0 0.0
    %626 = vmatprep.subr.mxu0 0.0
    %627 = vmatpush1.xpose.msra.mxu0 0.0
    %628 = vmatprep.subr.mxu0 0.0
    %629 = vmatpush1.xpose.msra.mxu0 0.0
    %630 = vmatprep.subr.mxu0 0.0
    %631 = vmatpush1.xpose.msra.mxu0 0.0
    %632 = vmatprep.subr.mxu0 0.0
    %633 = vmatpush1.xpose.msra.mxu0 0.0
    %634 = vmatprep.subr.mxu0 0.0
    %635 = vmatpush1.xpose.msra.mxu0 0.0
    %636 = vmatprep.subr.mxu0 0.0
    %637 = vmatpush1.xpose.msra.mxu0 0.0
    %638 = vmatprep.subr.mxu0 0.0
    %639 = vmatpush1.xpose.msra.mxu0 0.0
    %640 = vmatprep.subr.mxu0 0.0
    %641 = vmatpush1.xpose.msra.mxu0 0.0
    %642 = vmatprep.subr.mxu0 0.0
    %643 = vmatpush1.xpose.msra.mxu0 0.0
    %644 = vmatprep.subr.mxu0 0.0
    %645 = vmatpush1.xpose.msra.mxu0 0.0
    %646 = vmatprep.subr.mxu0 0.0
    %647 = vmatpush1.xpose.msra.mxu0 0.0
    %648 = vmatprep.subr.mxu0 0.0
    %649 = vmatpush1.xpose.msra.mxu0 0.0
    %650 = vmatprep.subr.mxu0 0.0
    %651 = vmatpush1.xpose.msra.mxu0 0.0
    %652 = vmatprep.subr.mxu0 0.0
    %653 = vmatpush1.xpose.msra.mxu0 0.0
    %654 = vmatprep.subr.mxu0 0.0
    %655 = vmatpush1.xpose.msra.mxu0 0.0
    %656 = vmatprep.subr.mxu0 0.0
    %657 = vmatpush1.xpose.msra.mxu0 0.0
    %658 = vmatprep.subr.mxu0 0.0
    %659 = vmatpush1.xpose.msra.mxu0 0.0
    %660 = vmatprep.subr.mxu0 0.0
    %661 = vmatpush1.xpose.msra.mxu0 0.0
    %662 = vmatprep.mubr.f32.mxu0 %v576
    %663 = vmatmul.mubr.f32.gmra.mrb[0].mxu0 %v575
    %v664 = vpop.f32.mrb[0].mxu0
    %v665 = vadd.f32 0.0, %v664
    %v666 = vpop.f32.mrb[0].mxu0
    %667 = vdwg.mxu0
    %668 = vst.msk [vmem:[#allocation2 + $0x1] sm:$0x1] %vm360, %v665
    // Predicated region
    $region18: #{tpu_custom_call.1} parent=1 // pred_check
      _
    $region19: #{tpu_custom_call.1} parent=1 // pred_check_branch
      %670 = sbr.rel (0) target = $region21
    $region20: #{tpu_custom_call.1} parent=1 // pred_region
      %s672 = ssub.s32 32, 32
      %673 = vsyncadd [#allocation3], %s672
      %s675 = sshll.u32 [#allocation2], 4
      %s676 = int_to_ptr.vmem [resolvable:$true] %s675
      %678 = dma.vmem_to_hbm [thread:$0]  %s676, 32, %s4, [#allocation3]
    $region21: #{tpu_custom_call.1} parent=1 // pred_fallthru
      _
    // Predicated region
    $region22: #{tpu_custom_call.1} parent=1 // pred_check
      _
    $region23: #{tpu_custom_call.1} parent=1 // pred_check_branch
      %680 = sbr.rel (0) target = $region25
    $region24: #{tpu_custom_call.1} parent=1 // pred_region
      %s682 = ssub.s32 64, 64
      %683 = vsyncadd [#allocation5], %s682
      %s685 = sshll.u32 [#allocation4], 4
      %s686 = int_to_ptr.vmem [resolvable:$true] %s685
      %688 = dma.vmem_to_hbm [thread:$0]  %s686, 64, %s5, [#allocation5]
    $region25: #{tpu_custom_call.1} parent=1 // pred_fallthru
      _
    // Predicated region
    $region26: #{tpu_custom_call.1} parent=1 // pred_check
      _
    $region27: #{tpu_custom_call.1} parent=1 // pred_check_branch
      %690 = sbr.rel (0) target = $region29
    $region28: #{tpu_custom_call.1} parent=1 // pred_region
      %691 = dma.done [#allocation3], 32
    $region29: #{tpu_custom_call.1} parent=1 // pred_fallthru
      _
    // Predicated region
    $region30: #{tpu_custom_call.1} parent=1 // pred_check
      _
    $region31: #{tpu_custom_call.1} parent=1 // pred_check_branch
      %693 = sbr.rel (0) target = $region33
    $region32: #{tpu_custom_call.1} parent=1 // pred_region
      %694 = dma.done [#allocation5], 64
    $region33: #{tpu_custom_call.1} parent=1 // pred_fallthru
      _
    %695 = vsyncpa [#allocation3], 1
    %696 = vsyncpa [#allocation5], 1

</llo_original>
